<compile_context>
chip_gen: v7x
topology: tpu7x:2x2x1
jax: 0.10.0
libtpu: 0.0.40
codegen_flags: <defaults>
</compile_context>

<pallas_src>
import jax
import jax.numpy as jnp
from jax.experimental import pallas as pl
from jax.experimental.pallas import tpu as pltpu


# ------------------------------ Pallas kernel ------------------------------ #
def _mish(x):
    # Mish(x) = x * tanh(softplus(x)) = x * ((1+e^x)^2 - 1) / ((1+e^x)^2 + 1)
    # Clamp keeps e^x finite; for x > 20 the ratio is 1.0 to f32 precision so
    # the clamp is exact.  Single EUP exp + one approx reciprocal.
    ex = jnp.exp(jnp.minimum(x, 20.0))
    s = 1.0 + ex
    s2 = s * s
    return x * ((s2 - 1.0) * pl.reciprocal(s2 + 1.0, approx=True))


def _conv_row_layer(x, w_ref, b_ref):
    """One 3x3 conv (stride 1, pad 1) + bias + Mish on a row-packed image.

    x:     (H, Wp*Cin)  f32; lanes carry (w, cin) packed; padded columns are 0.
    w_ref: (3, Wp*Cin, Wp*Cout) block-structured matrices, one per vertical tap.
    b_ref: (1, Wp*Cout) bias tiled over real columns (0 on padded columns).
    """
    H, L = x.shape
    mxu_dtype = w_ref.dtype  # f32, or bf16 for 2x MXU rate / half weight HBM bytes
    zrow = jnp.zeros((1, L), dtype=x.dtype)
    x_up = jnp.concatenate([zrow, x[: H - 1, :]], axis=0)   # row h-1 (zero top pad)
    x_dn = jnp.concatenate([x[1:, :], zrow], axis=0)        # row h+1 (zero bottom pad)
    acc = jnp.dot(x_up.astype(mxu_dtype), w_ref[0], preferred_element_type=jnp.float32)
    acc = acc + jnp.dot(x.astype(mxu_dtype), w_ref[1], preferred_element_type=jnp.float32)
    acc = acc + jnp.dot(x_dn.astype(mxu_dtype), w_ref[2], preferred_element_type=jnp.float32)
    acc = acc + b_ref[...].astype(jnp.float32)               # epilogue stays f32
    return _mish(acc)


def _two_conv_mish_kernel(x_ref, w1_ref, b1_ref, w2_ref, b2_ref, o_ref):
    x = x_ref[0].astype(jnp.float32)            # (H, Wp*C)
    h1 = _conv_row_layer(x, w1_ref, b1_ref)     # layer-1 activation stays on-chip
    h2 = _conv_row_layer(h1, w2_ref, b2_ref)
    o_ref[0] = h2.astype(o_ref.dtype)           # lane-dense (last dim multiple of 128)


# ----------------------------- host-side packing ---------------------------- #
def _lane_padded_width(W, C):
    Wp = W
    while (Wp * C) % 128 != 0:
        Wp += 1
    return Wp


def _pack_input(x_nchw, Wp):
    N, C, H, W = x_nchw.shape
    x = jnp.transpose(x_nchw, (0, 2, 3, 1))                  # NCHW -> NHWC
    if Wp > W:
        x = jnp.pad(x, ((0, 0), (0, 0), (0, Wp - W), (0, 0)))
    return x.reshape(N, H, Wp * C)                           # lanes = (w, c) packed


def _pack_conv_weight(w, W, Wp, mxu_dtype):
    """(Cout, Cin, 3, 3) torch-layout weight -> (3, Wp*Cin, Wp*Cout) matrices.

    mats[ky][wi*Cin + ci, wc*Cout + co] = w[co, ci, ky, wi - wc + 1]
    for real columns wi, wc < W with |wi - wc| <= 1, else 0.  Horizontal zero
    padding and the lane padding both live in the zeros of these matrices.
    """
    Cout, Cin, KH, KW = w.shape
    assert KH == 3 and KW == 3
    wi = jnp.arange(Wp)[:, None]
    wc = jnp.arange(Wp)[None, :]
    sel = jnp.stack(
        [((wi == wc + (kx - 1)) & (wi < W) & (wc < W)).astype(w.dtype) for kx in range(3)],
        axis=0)                                              # (3, Wp, Wp)
    w_t = jnp.transpose(w, (1, 0, 2, 3))                     # (Cin, Cout, 3, 3)
    mats = []
    for ky in range(3):
        m = jnp.einsum("xab,cdx->acbd", sel, w_t[:, :, ky, :])   # (Wp,Cin,Wp,Cout)
        mats.append(m.reshape(Wp * Cin, Wp * Cout))
    return jnp.stack(mats, axis=0).astype(mxu_dtype)


def _pack_bias(b, W, Wp):
    Cout = b.shape[0]
    bt = jnp.tile(b, W)                                      # bias per real column
    bt = jnp.pad(bt, (0, (Wp - W) * Cout))                   # 0 on padded columns
    return bt.reshape(1, Wp * Cout).astype(jnp.float32)


# --------------------------------- wrapper ---------------------------------- #
def two_block_2d(x_nchw, params, *, mxu_dtype=jnp.float32):
    """TwoBlock2D.forward: x -> Mish(conv1(x)) -> Mish(conv2(.)).

    (`identity = x` in the torch code is unused; Dropout2d is constructed but
    never applied in WNConvActiv.forward, so eval semantics are exact.)
    Set mxu_dtype=jnp.bfloat16 on v6e/v7x for 2x MXU rate and half the weight
    HBM traffic; the bias + Mish epilogue always runs in f32.
    """
    N, C, H, W = x_nchw.shape
    (w1, b1), (w2, b2) = params
    assert w1.shape[:2] == (C, C) and w2.shape[:2] == (C, C)  # module uses Cin == Cout

    Wp = _lane_padded_width(W, C)
    L = Wp * C

    xp = _pack_input(x_nchw, Wp)
    w1m = _pack_conv_weight(w1, W, Wp, mxu_dtype)
    w2m = _pack_conv_weight(w2, W, Wp, mxu_dtype)
    b1v = _pack_bias(b1, W, Wp)
    b2v = _pack_bias(b2, W, Wp)

    out = pl.pallas_call(
        _two_conv_mish_kernel,
        out_shape=jax.ShapeDtypeStruct((N, H, L), x_nchw.dtype),
        grid_spec=pltpu.PrefetchScalarGridSpec(
            num_scalar_prefetch=0,
            grid=(N,),                                        # one image per step
            in_specs=[
                pl.BlockSpec((1, H, L), lambda n: (n, 0, 0)),  # image (lane-dense)
                pl.BlockSpec((3, L, L), lambda n: (0, 0, 0)),  # layer-1 tap matrices
                pl.BlockSpec((1, L), lambda n: (0, 0)),        # layer-1 bias
                pl.BlockSpec((3, L, L), lambda n: (0, 0, 0)),  # layer-2 tap matrices
                pl.BlockSpec((1, L), lambda n: (0, 0)),        # layer-2 bias
            ],
            out_specs=pl.BlockSpec((1, H, L), lambda n: (n, 0, 0)),
        ),
        compiler_params=pltpu.CompilerParams(
            dimension_semantics=("parallel",)),
    )(xp, w1m, b1v, w2m, b2v)

    out = out.reshape(N, H, Wp, C)[:, :, :W, :]               # drop lane padding
    return jnp.transpose(out, (0, 3, 1, 2))                   # NHWC -> NCHW


# ----------------------------- pure-JAX reference ---------------------------- #
def _ref_two_block(x, params):
    y = x
    for (w, b) in params:
        y = jax.lax.conv_general_dilated(
            y, w, window_strides=(1, 1), padding=((1, 1), (1, 1)),
            rhs_dilation=(1, 1), dimension_numbers=("NCHW", "OIHW", "NCHW"))
        y = y + b[None, :, None, None]
        y = y * jnp.tanh(jax.nn.softplus(y))
    return y


if __name__ == "__main__":
    # TwoBlock2D(out_channels=8, kernel_size=3, stride=1, padding=1,
    #            dilations=[1, 1], biases=[True, True], with_dropout=False)
    N, C, H, W = 2, 8, 16, 16            # W*C = 128 -> already lane-dense
    key = jax.random.PRNGKey(0)
    k1, k2, k3, k4, kx = jax.random.split(key, 5)

    # torch Conv2d weight layout: (Cout, Cin, kH, kW)
    w1 = 0.1 * jax.random.normal(k1, (C, C, 3, 3), dtype=jnp.float32)
    b1 = 0.1 * jax.random.normal(k2, (C,), dtype=jnp.float32)
    w2 = 0.1 * jax.random.normal(k3, (C, C, 3, 3), dtype=jnp.float32)
    b2 = 0.1 * jax.random.normal(k4, (C,), dtype=jnp.float32)
    params = [(w1, b1), (w2, b2)]

    x = jax.random.normal(kx, (N, C, H, W), dtype=jnp.float32)

    fwd = jax.jit(lambda xi: two_block_2d(xi, params))
    out = jax.block_until_ready(fwd(x))

    ref = jax.block_until_ready(_ref_two_block(x, params))
    assert out.shape == (N, C, H, W)
    # slightly relaxed tolerance: Mish epilogue uses pl.reciprocal(approx=True)
    assert jnp.allclose(out, ref, rtol=5e-3, atol=5e-3), float(jnp.max(jnp.abs(out - ref)))

    print("KERNEL_OK")
</pallas_src>

<mosaic_0001>
module attributes {stable_mosaic.version = 11 : i64} {
  func.func @_two_conv_mish_kernel(%arg0: i32, %arg1: memref<1x16x128xf32, #tpu.memory_space<vmem>>, %arg2: memref<3x128x128xf32, #tpu.memory_space<vmem>>, %arg3: memref<1x128xf32, #tpu.memory_space<vmem>>, %arg4: memref<3x128x128xf32, #tpu.memory_space<vmem>>, %arg5: memref<1x128xf32, #tpu.memory_space<vmem>>, %arg6: memref<1x16x128xf32, #tpu.memory_space<vmem>>) attributes {dimension_semantics = [#tpu.dimension_semantics<parallel>], iteration_bounds = array<i64: 2>, scalar_prefetch = 0 : i64, scratch_operands = 0 : i64, tpu.core_type = #tpu.core_type<tc>, window_params = [{transform_indices = @transform_0, window_bounds = array<i64: 1, 16, 128>}, {pipeline_mode = #tpu.pipeline_mode<synchronous>, transform_indices = @transform_1, window_bounds = array<i64: 3, 128, 128>}, {pipeline_mode = #tpu.pipeline_mode<synchronous>, transform_indices = @transform_2, window_bounds = array<i64: 1, 128>}, {pipeline_mode = #tpu.pipeline_mode<synchronous>, transform_indices = @transform_3, window_bounds = array<i64: 3, 128, 128>}, {pipeline_mode = #tpu.pipeline_mode<synchronous>, transform_indices = @transform_4, window_bounds = array<i64: 1, 128>}, {transform_indices = @transform_5, window_bounds = array<i64: 1, 16, 128>}]} {
    %c0 = arith.constant 0 : index
    %c0_0 = arith.constant 0 : index
    %c0_1 = arith.constant 0 : index
    %0 = vector.load %arg1[%c0, %c0_0, %c0_1] : memref<1x16x128xf32, #tpu.memory_space<vmem>>, vector<1x16x128xf32>
    %1 = vector.shape_cast %0 : vector<1x16x128xf32> to vector<16x128xf32>
    %cst = arith.constant 0.000000e+00 : f32
    %2 = vector.broadcast %cst : f32 to vector<1x128xf32>
    %3 = vector.extract_strided_slice %1 {offsets = [0, 0], sizes = [15, 128], strides = [1, 1]} : vector<16x128xf32> to vector<15x128xf32>
    %4 = tpu.concatenate %2, %3 in 0 : vector<1x128xf32>, vector<15x128xf32> -> vector<16x128xf32>
    %5 = vector.extract_strided_slice %1 {offsets = [1, 0], sizes = [15, 128], strides = [1, 1]} : vector<16x128xf32> to vector<15x128xf32>
    %6 = tpu.concatenate %5, %2 in 0 : vector<15x128xf32>, vector<1x128xf32> -> vector<16x128xf32>
    %c0_2 = arith.constant 0 : index
    %c0_3 = arith.constant 0 : index
    %c0_4 = arith.constant 0 : index
    %7 = vector.load %arg2[%c0_2, %c0_3, %c0_4] : memref<3x128x128xf32, #tpu.memory_space<vmem>>, vector<1x128x128xf32>
    %8 = vector.shape_cast %7 : vector<1x128x128xf32> to vector<128x128xf32>
    %cst_5 = arith.constant dense<0.000000e+00> : vector<16x128xf32>
    %9 = tpu.matmul %4, %8, %cst_5 {dimension_numbers = #tpu.dot_dimension_numbers<[1], [0], [0], [1], [0, 0, 1, 1], [], []>} : vector<16x128xf32>, vector<128x128xf32>, vector<16x128xf32> -> vector<16x128xf32>
    %c1 = arith.constant 1 : index
    %c0_6 = arith.constant 0 : index
    %c0_7 = arith.constant 0 : index
    %10 = vector.load %arg2[%c1, %c0_6, %c0_7] : memref<3x128x128xf32, #tpu.memory_space<vmem>>, vector<1x128x128xf32>
    %11 = vector.shape_cast %10 : vector<1x128x128xf32> to vector<128x128xf32>
    %cst_8 = arith.constant dense<0.000000e+00> : vector<16x128xf32>
    %12 = tpu.matmul %1, %11, %cst_8 {dimension_numbers = #tpu.dot_dimension_numbers<[1], [0], [0], [1], [0, 0, 1, 1], [], []>} : vector<16x128xf32>, vector<128x128xf32>, vector<16x128xf32> -> vector<16x128xf32>
    %13 = arith.addf %9, %12 : vector<16x128xf32>
    %c2 = arith.constant 2 : index
    %c0_9 = arith.constant 0 : index
    %c0_10 = arith.constant 0 : index
    %14 = vector.load %arg2[%c2, %c0_9, %c0_10] : memref<3x128x128xf32, #tpu.memory_space<vmem>>, vector<1x128x128xf32>
    %15 = vector.shape_cast %14 : vector<1x128x128xf32> to vector<128x128xf32>
    %cst_11 = arith.constant dense<0.000000e+00> : vector<16x128xf32>
    %16 = tpu.matmul %6, %15, %cst_11 {dimension_numbers = #tpu.dot_dimension_numbers<[1], [0], [0], [1], [0, 0, 1, 1], [], []>} : vector<16x128xf32>, vector<128x128xf32>, vector<16x128xf32> -> vector<16x128xf32>
    %17 = arith.addf %13, %16 : vector<16x128xf32>
    %c0_12 = arith.constant 0 : index
    %c0_13 = arith.constant 0 : index
    %18 = vector.load %arg3[%c0_12, %c0_13] : memref<1x128xf32, #tpu.memory_space<vmem>>, vector<1x128xf32>
    %19 = vector.broadcast %18 : vector<1x128xf32> to vector<16x128xf32>
    %20 = arith.addf %17, %19 : vector<16x128xf32>
    %cst_14 = arith.constant 2.000000e+01 : f32
    %21 = vector.broadcast %cst_14 : f32 to vector<16x128xf32>
    %22 = arith.minimumf %20, %21 : vector<16x128xf32>
    %23 = math.exp %22 : vector<16x128xf32>
    %cst_15 = arith.constant 1.000000e+00 : f32
    %24 = vector.broadcast %cst_15 : f32 to vector<16x128xf32>
    %25 = arith.addf %24, %23 : vector<16x128xf32>
    %26 = arith.mulf %25, %25 : vector<16x128xf32>
    %cst_16 = arith.constant 1.000000e+00 : f32
    %27 = vector.broadcast %cst_16 : f32 to vector<16x128xf32>
    %28 = arith.subf %26, %27 : vector<16x128xf32>
    %cst_17 = arith.constant 1.000000e+00 : f32
    %29 = vector.broadcast %cst_17 : f32 to vector<16x128xf32>
    %30 = arith.addf %26, %29 : vector<16x128xf32>
    %31 = tpu.reciprocal %30 {approx = true} : vector<16x128xf32> -> vector<16x128xf32>
    %32 = arith.mulf %28, %31 : vector<16x128xf32>
    %33 = arith.mulf %20, %32 : vector<16x128xf32>
    %cst_18 = arith.constant 0.000000e+00 : f32
    %34 = vector.broadcast %cst_18 : f32 to vector<1x128xf32>
    %35 = vector.extract_strided_slice %33 {offsets = [0, 0], sizes = [15, 128], strides = [1, 1]} : vector<16x128xf32> to vector<15x128xf32>
    %36 = tpu.concatenate %34, %35 in 0 : vector<1x128xf32>, vector<15x128xf32> -> vector<16x128xf32>
    %37 = vector.extract_strided_slice %33 {offsets = [1, 0], sizes = [15, 128], strides = [1, 1]} : vector<16x128xf32> to vector<15x128xf32>
    %38 = tpu.concatenate %37, %34 in 0 : vector<15x128xf32>, vector<1x128xf32> -> vector<16x128xf32>
    %c0_19 = arith.constant 0 : index
    %c0_20 = arith.constant 0 : index
    %c0_21 = arith.constant 0 : index
    %39 = vector.load %arg4[%c0_19, %c0_20, %c0_21] : memref<3x128x128xf32, #tpu.memory_space<vmem>>, vector<1x128x128xf32>
    %40 = vector.shape_cast %39 : vector<1x128x128xf32> to vector<128x128xf32>
    %cst_22 = arith.constant dense<0.000000e+00> : vector<16x128xf32>
    %41 = tpu.matmul %36, %40, %cst_22 {dimension_numbers = #tpu.dot_dimension_numbers<[1], [0], [0], [1], [0, 0, 1, 1], [], []>} : vector<16x128xf32>, vector<128x128xf32>, vector<16x128xf32> -> vector<16x128xf32>
    %c1_23 = arith.constant 1 : index
    %c0_24 = arith.constant 0 : index
    %c0_25 = arith.constant 0 : index
    %42 = vector.load %arg4[%c1_23, %c0_24, %c0_25] : memref<3x128x128xf32, #tpu.memory_space<vmem>>, vector<1x128x128xf32>
    %43 = vector.shape_cast %42 : vector<1x128x128xf32> to vector<128x128xf32>
    %cst_26 = arith.constant dense<0.000000e+00> : vector<16x128xf32>
    %44 = tpu.matmul %33, %43, %cst_26 {dimension_numbers = #tpu.dot_dimension_numbers<[1], [0], [0], [1], [0, 0, 1, 1], [], []>} : vector<16x128xf32>, vector<128x128xf32>, vector<16x128xf32> -> vector<16x128xf32>
    %45 = arith.addf %41, %44 : vector<16x128xf32>
    %c2_27 = arith.constant 2 : index
    %c0_28 = arith.constant 0 : index
    %c0_29 = arith.constant 0 : index
    %46 = vector.load %arg4[%c2_27, %c0_28, %c0_29] : memref<3x128x128xf32, #tpu.memory_space<vmem>>, vector<1x128x128xf32>
    %47 = vector.shape_cast %46 : vector<1x128x128xf32> to vector<128x128xf32>
    %cst_30 = arith.constant dense<0.000000e+00> : vector<16x128xf32>
    %48 = tpu.matmul %38, %47, %cst_30 {dimension_numbers = #tpu.dot_dimension_numbers<[1], [0], [0], [1], [0, 0, 1, 1], [], []>} : vector<16x128xf32>, vector<128x128xf32>, vector<16x128xf32> -> vector<16x128xf32>
    %49 = arith.addf %45, %48 : vector<16x128xf32>
    %c0_31 = arith.constant 0 : index
    %c0_32 = arith.constant 0 : index
    %50 = vector.load %arg5[%c0_31, %c0_32] : memref<1x128xf32, #tpu.memory_space<vmem>>, vector<1x128xf32>
    %51 = vector.broadcast %50 : vector<1x128xf32> to vector<16x128xf32>
    %52 = arith.addf %49, %51 : vector<16x128xf32>
    %cst_33 = arith.constant 2.000000e+01 : f32
    %53 = vector.broadcast %cst_33 : f32 to vector<16x128xf32>
    %54 = arith.minimumf %52, %53 : vector<16x128xf32>
    %55 = math.exp %54 : vector<16x128xf32>
    %cst_34 = arith.constant 1.000000e+00 : f32
    %56 = vector.broadcast %cst_34 : f32 to vector<16x128xf32>
    %57 = arith.addf %56, %55 : vector<16x128xf32>
    %58 = arith.mulf %57, %57 : vector<16x128xf32>
    %cst_35 = arith.constant 1.000000e+00 : f32
    %59 = vector.broadcast %cst_35 : f32 to vector<16x128xf32>
    %60 = arith.subf %58, %59 : vector<16x128xf32>
    %cst_36 = arith.constant 1.000000e+00 : f32
    %61 = vector.broadcast %cst_36 : f32 to vector<16x128xf32>
    %62 = arith.addf %58, %61 : vector<16x128xf32>
    %63 = tpu.reciprocal %62 {approx = true} : vector<16x128xf32> -> vector<16x128xf32>
    %64 = arith.mulf %60, %63 : vector<16x128xf32>
    %65 = arith.mulf %52, %64 : vector<16x128xf32>
    %c0_37 = arith.constant 0 : index
    %c0_38 = arith.constant 0 : index
    %c0_39 = arith.constant 0 : index
    %66 = vector.load %arg6[%c0_37, %c0_38, %c0_39] : memref<1x16x128xf32, #tpu.memory_space<vmem>>, vector<1x16x128xf32>
    %67 = vector.shape_cast %66 : vector<1x16x128xf32> to vector<16x128xf32>
    %68 = vector.shape_cast %65 : vector<16x128xf32> to vector<1x16x128xf32>
    tpu.vector_store %arg6[%c0_37, %c0_38, %c0_39], %68 {strides = array<i32>} : memref<1x16x128xf32, #tpu.memory_space<vmem>>, vector<1x16x128xf32>,
    return
  }
  func.func @transform_0(%arg0: i32) -> (i32, i32, i32) {
    %c0_i32 = arith.constant 0 : i32
    %c0_i32_0 = arith.constant 0 : i32
    %c0_i32_1 = arith.constant 0 : i32
    return %arg0, %c0_i32, %c0_i32_0 : i32, i32, i32
  }
  func.func @transform_1(%arg0: i32) -> (i32, i32, i32) {
    %c0_i32 = arith.constant 0 : i32
    %c0_i32_0 = arith.constant 0 : i32
    %c0_i32_1 = arith.constant 0 : i32
    %c0_i32_2 = arith.constant 0 : i32
    return %c0_i32, %c0_i32_0, %c0_i32_1 : i32, i32, i32
  }
  func.func @transform_2(%arg0: i32) -> (i32, i32) {
    %c0_i32 = arith.constant 0 : i32
    %c0_i32_0 = arith.constant 0 : i32
    %c0_i32_1 = arith.constant 0 : i32
    return %c0_i32, %c0_i32_0 : i32, i32
  }
  func.func @transform_3(%arg0: i32) -> (i32, i32, i32) {
    %c0_i32 = arith.constant 0 : i32
    %c0_i32_0 = arith.constant 0 : i32
    %c0_i32_1 = arith.constant 0 : i32
    %c0_i32_2 = arith.constant 0 : i32
    return %c0_i32, %c0_i32_0, %c0_i32_1 : i32, i32, i32
  }
  func.func @transform_4(%arg0: i32) -> (i32, i32) {
    %c0_i32 = arith.constant 0 : i32
    %c0_i32_0 = arith.constant 0 : i32
    %c0_i32_1 = arith.constant 0 : i32
    return %c0_i32, %c0_i32_0 : i32, i32
  }
  func.func @transform_5(%arg0: i32) -> (i32, i32, i32) {
    %c0_i32 = arith.constant 0 : i32
    %c0_i32_0 = arith.constant 0 : i32
    %c0_i32_1 = arith.constant 0 : i32
    return %arg0, %c0_i32, %c0_i32_0 : i32, i32, i32
  }
}

</mosaic_0001>

<llo_original>
// kernel: tile.10
$region0: #{tile.10}
  #allocation0 [shape = 's32[1]{0}', space=sflag, size = 0x4, scoped, tag = 'scoped memory for tile.10']
  %s0 = inlined_call_operand.vmem [shape: f32[8], index: 0, kind: input, shape index: {}]
  %s1 = inlined_call_operand.vmem [shape: f32[16,8], index: 1, kind: output, shape index: {}]
  // Predicated region
  $region2: #{tile.10} parent=0 // pred_check
    _
  $region3: #{tile.10} parent=0 // pred_check_branch
    %3 = sbr.rel (0) target = $region5
  $region4: #{tile.10} parent=0 // pred_region
    _
  $region5: #{tile.10} parent=0 // pred_fallthru
    _
  %v4 = vld [vmem:[%s0] ss:$0 sm:$0xff]
  %5 = vst [vmem:[%s1] sm:$0xff] %v4
  %s6 = scalar_lea.vmem %s1, 8
  %7 = vst [vmem:[%s6] sm:$0xff] %v4

// kernel: _lambda_.1
$region0: #{_lambda_.1}
  #allocation0 [shape = 'u32[]', space=smem, size = 0x4, offset = 0x4, fixed_abs, tag = 'smem constant byte address 0x4 - core index']
  #allocation1 [shape = 'u32[144,128]{1,0:T(1,128)}', space=vmem, size = 0x12000, scoped, tag = 'internal scratch']
  %s0 = inlined_call_operand.vmem [shape: f32[2,16,128], index: 0, kind: input, shape index: {}]
  %s1 = inlined_call_operand.vmem [shape: f32[3,128,128], index: 1, kind: input, shape index: {}]
  %s2 = inlined_call_operand.vmem [shape: f32[1,128], index: 2, kind: input, shape index: {}]
  %s3 = inlined_call_operand.vmem [shape: f32[3,128,128], index: 3, kind: input, shape index: {}]
  %s4 = inlined_call_operand.vmem [shape: f32[1,128], index: 4, kind: input, shape index: {}]
  %s5 = inlined_call_operand.vmem [shape: f32[2,16,128], index: 5, kind: output, shape index: {}]
  %s6 = sld [smem:[#allocation0]]
  $region53: #{_lambda_.1} parent=0
    _
  %s8 = ssub.s32 1, %s6
  %s9 = scalar_select 0, %s8, %s6
  loop: start=0, step=1, limit=4
  $region2: #{_lambda_.1} parent=0 // loop_pre_header
    _
  $region3: #{_lambda_.1} parent=0 // loop_header
    %s11 = sphi 0, %s15
    %p12 = scmp.ge.s32.totalorder %s11, 4
    %s21 = sphi 0, %s23
    %s24 = sphi 0, %s21
    %s25 = sphi 0, %s24
    %s41 = sphi 0, %s25
    %s45 = sphi 0, %s45
    %s47 = sphi 0, %s45
    %s48 = sphi 0, %s47
    %s62 = sphi 0, %s48
    %s66 = sphi 0, %s66
    %s68 = sphi 0, %s66
    %s69 = sphi 0, %s68
    %s83 = sphi 0, %s69
    %s87 = sphi 0, %s87
    %s89 = sphi 0, %s87
    %s90 = sphi 0, %s89
    %s104 = sphi 0, %s90
    %s108 = sphi 0, %s108
    %s110 = sphi 0, %s108
    %s111 = sphi 0, %s110
    %s125 = sphi 0, %s111
    %s131 = sphi 0, %s133
    %s134 = sphi 0, %s131
    %s135 = sphi 0, %s134
    %s151 = sphi 0, %s135
  $region4: #{_lambda_.1} parent=0 // loop_header_branch
    %14 = sbr.rel (%p12) target = $region8
  $region5: #{_lambda_.1} parent=0 // loop_body
    %s16 = ssub.s32 %s11, 1
    %s17 = ssub.s32 %s11, 2
    %s18 = sadd.s32 %s11, 1
    %s19 = ssub.s32 %s11, %s18
    %p20 = scmp.eq.s32.totalorder %s19, 0
    %s22 = sadd.s32 %s21, 1
    %s23 = scalar_select %p20, %s21, %s22
    %p26 = pneg %p20
    %p27 = scmp.eq.s32.totalorder %s11, 1
    %p28 = por %p26, %p27
    %p29 = scmp.ne.s32.totalorder %s21, %s24
    %p30 = scmp.eq.s32.totalorder %s11, 0
    %p31 = por %p29, %p30
    %p32 = scmp.ne.s32.totalorder %s21, %s24
    %p33 = scmp.eq.s32.totalorder %s16, 1
    %p34 = por %p32, %p33
    %p35 = scmp.ne.s32.totalorder %s24, %s25
    %p36 = scmp.eq.s32.totalorder %s16, 0
    %p37 = por %p35, %p36
    %p38 = scmp.ne.s32.totalorder %s24, %s25
    %p39 = scmp.eq.s32.totalorder %s17, 1
    %p40 = por %p38, %p39
    %p42 = scmp.ne.s32.totalorder %s25, %s41
    %p43 = scmp.eq.s32.totalorder %s17, 0
    %p44 = por %p42, %p43
    %s46 = sadd.s32 %s45, 1
    %p49 = scmp.eq.s32.totalorder %s11, 1
    %p50 = scmp.ne.s32.totalorder %s45, %s47
    %p51 = scmp.eq.s32.totalorder %s11, 0
    %p52 = por %p50, %p51
    %p53 = scmp.ne.s32.totalorder %s45, %s47
    %p54 = scmp.eq.s32.totalorder %s16, 1
    %p55 = por %p53, %p54
    %p56 = scmp.ne.s32.totalorder %s47, %s48
    %p57 = scmp.eq.s32.totalorder %s16, 0
    %p58 = por %p56, %p57
    %p59 = scmp.ne.s32.totalorder %s47, %s48
    %p60 = scmp.eq.s32.totalorder %s17, 1
    %p61 = por %p59, %p60
    %p63 = scmp.ne.s32.totalorder %s48, %s62
    %p64 = scmp.eq.s32.totalorder %s17, 0
    %p65 = por %p63, %p64
    %s67 = sadd.s32 %s66, 1
    %p70 = scmp.eq.s32.totalorder %s11, 1
    %p71 = scmp.ne.s32.totalorder %s66, %s68
    %p72 = scmp.eq.s32.totalorder %s11, 0
    %p73 = por %p71, %p72
    %p74 = scmp.ne.s32.totalorder %s66, %s68
    %p75 = scmp.eq.s32.totalorder %s16, 1
    %p76 = por %p74, %p75
    %p77 = scmp.ne.s32.totalorder %s68, %s69
    %p78 = scmp.eq.s32.totalorder %s16, 0
    %p79 = por %p77, %p78
    %p80 = scmp.ne.s32.totalorder %s68, %s69
    %p81 = scmp.eq.s32.totalorder %s17, 1
    %p82 = por %p80, %p81
    %p84 = scmp.ne.s32.totalorder %s69, %s83
    %p85 = scmp.eq.s32.totalorder %s17, 0
    %p86 = por %p84, %p85
    %s88 = sadd.s32 %s87, 1
    %p91 = scmp.eq.s32.totalorder %s11, 1
    %p92 = scmp.ne.s32.totalorder %s87, %s89
    %p93 = scmp.eq.s32.totalorder %s11, 0
    %p94 = por %p92, %p93
    %p95 = scmp.ne.s32.totalorder %s87, %s89
    %p96 = scmp.eq.s32.totalorder %s16, 1
    %p97 = por %p95, %p96
    %p98 = scmp.ne.s32.totalorder %s89, %s90
    %p99 = scmp.eq.s32.totalorder %s16, 0
    %p100 = por %p98, %p99
    %p101 = scmp.ne.s32.totalorder %s89, %s90
    %p102 = scmp.eq.s32.totalorder %s17, 1
    %p103 = por %p101, %p102
    %p105 = scmp.ne.s32.totalorder %s90, %s104
    %p106 = scmp.eq.s32.totalorder %s17, 0
    %p107 = por %p105, %p106
    %s109 = sadd.s32 %s108, 1
    %p112 = scmp.eq.s32.totalorder %s11, 1
    %p113 = scmp.ne.s32.totalorder %s108, %s110
    %p114 = scmp.eq.s32.totalorder %s11, 0
    %p115 = por %p113, %p114
    %p116 = scmp.ne.s32.totalorder %s108, %s110
    %p117 = scmp.eq.s32.totalorder %s16, 1
    %p118 = por %p116, %p117
    %p119 = scmp.ne.s32.totalorder %s110, %s111
    %p120 = scmp.eq.s32.totalorder %s16, 0
    %p121 = por %p119, %p120
    %p122 = scmp.ne.s32.totalorder %s110, %s111
    %p123 = scmp.eq.s32.totalorder %s17, 1
    %p124 = por %p122, %p123
    %p126 = scmp.ne.s32.totalorder %s111, %s125
    %p127 = scmp.eq.s32.totalorder %s17, 0
    %p128 = por %p126, %p127
    %s129 = ssub.s32 %s11, %s18
    %p130 = scmp.eq.s32.totalorder %s129, 0
    %s132 = sadd.s32 %s131, 1
    %s133 = scalar_select %p130, %s131, %s132
    %p136 = pneg %p130
    %p137 = scmp.eq.s32.totalorder %s11, 1
    %p138 = por %p136, %p137
    %p139 = scmp.ne.s32.totalorder %s131, %s134
    %p140 = scmp.eq.s32.totalorder %s11, 0
    %p141 = por %p139, %p140
    %p142 = scmp.ne.s32.totalorder %s131, %s134
    %p143 = scmp.eq.s32.totalorder %s16, 1
    %p144 = por %p142, %p143
    %p145 = scmp.ne.s32.totalorder %s134, %s135
    %p146 = scmp.eq.s32.totalorder %s16, 0
    %p147 = por %p145, %p146
    %p148 = scmp.ne.s32.totalorder %s134, %s135
    %p149 = scmp.eq.s32.totalorder %s17, 1
    %p150 = por %p148, %p149
    %p152 = scmp.ne.s32.totalorder %s135, %s151
    %p153 = scmp.eq.s32.totalorder %s17, 0
    %p154 = por %p152, %p153
    %p155 = scmp.le.s32.totalorder 1, %s11
    %p156 = scmp.lt.s32.totalorder %s11, 3
    %p157 = pnand %p155, %p156
    %p158 = pneg %p157
    // Predicated region
    $region9: #{_lambda_.1} parent=5 // pred_check
      _
    $region10: #{_lambda_.1} parent=5 // pred_check_branch
      %160 = sbr.rel (%p157) target = $region12
    $region11: #{_lambda_.1} parent=5 // pred_region
      %s161 = ssub.s32 %s11, 1
      // Predicated region
      $region13: #{_lambda_.1} parent=11 // pred_check
        %p162 = pneg %p58
      $region14: #{_lambda_.1} parent=11 // pred_check_branch
        %164 = sbr.rel (%p162) target = $region16
      $region15: #{_lambda_.1} parent=11 // pred_region
        _
      $region16: #{_lambda_.1} parent=11 // pred_fallthru
        _
      // Predicated region
      $region17: #{_lambda_.1} parent=11 // pred_check
        %p165 = pneg %p79
      $region18: #{_lambda_.1} parent=11 // pred_check_branch
        %167 = sbr.rel (%p165) target = $region20
      $region19: #{_lambda_.1} parent=11 // pred_region
        _
      $region20: #{_lambda_.1} parent=11 // pred_fallthru
        _
      // Predicated region
      $region21: #{_lambda_.1} parent=11 // pred_check
        %p168 = pneg %p100
      $region22: #{_lambda_.1} parent=11 // pred_check_branch
        %170 = sbr.rel (%p168) target = $region24
      $region23: #{_lambda_.1} parent=11 // pred_region
        _
      $region24: #{_lambda_.1} parent=11 // pred_fallthru
        _
      // Predicated region
      $region25: #{_lambda_.1} parent=11 // pred_check
        %p171 = pneg %p121
      $region26: #{_lambda_.1} parent=11 // pred_check_branch
        %173 = sbr.rel (%p171) target = $region28
      $region27: #{_lambda_.1} parent=11 // pred_region
        _
      $region28: #{_lambda_.1} parent=11 // pred_fallthru
        _
    $region12: #{_lambda_.1} parent=5 // pred_fallthru
      _
    %p174 = scmp.lt.s32.totalorder %s11, 2
    // Predicated region
    $region29: #{_lambda_.1} parent=5 // pred_check
      %p175 = pneg %p174
    $region30: #{_lambda_.1} parent=5 // pred_check_branch
      %177 = sbr.rel (%p175) target = $region32
    $region31: #{_lambda_.1} parent=5 // pred_region
      // Predicated region
      $region33: #{_lambda_.1} parent=31 // pred_check
        %p178 = pneg %p31
      $region34: #{_lambda_.1} parent=31 // pred_check_branch
        %180 = sbr.rel (%p178) target = $region36
      $region35: #{_lambda_.1} parent=31 // pred_region
        %p181 = scmp.lt.s32.totalorder %s11, 1
        %s182 = scalar_select %p181, %s11, 1
        %s183 = smul.addr %s182, 2
        %s184 = smul.addr %s183, 8
        %s185 = scalar_lea.vmem %s0, %s184
      $region36: #{_lambda_.1} parent=31 // pred_fallthru
        _
    $region32: #{_lambda_.1} parent=5 // pred_fallthru
      _
    %p186 = scmp.le.s32.totalorder 1, %s11
    %p187 = scmp.lt.s32.totalorder %s11, 3
    %p188 = pnand %p186, %p187
    %p189 = pneg %p188
    // Predicated region
    $region37: #{_lambda_.1} parent=5 // pred_check
      _
    $region38: #{_lambda_.1} parent=5 // pred_check_branch
      %191 = sbr.rel (%p188) target = $region40
    $region39: #{_lambda_.1} parent=5 // pred_region
      %s192 = ssub.s32 %s11, 1
      %p193 = scmp.lt.s32.totalorder %s16, 1
      %s194 = scalar_select %p193, %s16, 1
      %s195 = smul.addr %s194, 2
      %s196 = smul.addr %s195, 8
      %s197 = scalar_lea.vmem %s0, %s196
      %p198 = pneg %p37
      %p199 = pneg %p34
      %p200 = pneg %p58
      %p201 = pneg %p55
      %p202 = pneg %p79
      %p203 = pneg %p76
      %p204 = pneg %p100
      %p205 = pneg %p97
      %p206 = pneg %p121
      %p207 = pneg %p118
      %p208 = pneg %p147
      %p209 = pneg %p144
      %p210 = scmp.lt.s32.totalorder %s16, 1
      %s211 = scalar_select %p210, %s16, 1
      %s212 = smul.addr %s211, 2
      %s213 = smul.addr %s212, 8
      %s214 = scalar_lea.vmem %s5, %s213
      %p215 = scmp.lt.s32.totalorder %s16, 1
      %s216 = scalar_select %p215, %s16, 1
      %s217 = smul.addr %s216, 2
      %s218 = smul.addr %s217, 8
      %s219 = scalar_lea.vmem %s0, %s218
      %p220 = scmp.lt.s32.totalorder %s16, 1
      %s221 = scalar_select %p220, %s16, 1
      %s222 = smul.addr %s221, 2
      %s223 = smul.addr %s222, 8
      %s224 = scalar_lea.vmem %s5, %s223
      %v225 = vld [vmem:[%s219] sm:$0xff]
      %v226 = vld [vmem:[%s219 + $0x8] sm:$0xff]
      %vm229 = vcmask 1040384
      %v230 = vrot.slane %v225, 7
      %v231 = vrot.slane %v226, 7
      %v232 = vsel %vm229, %v230, %v231
      %v235 = vsel %vm229, 0.0, %v230
      %vm236 = vcmask 1046528
      %v237 = vrot.slane %v225, 1
      %v238 = vrot.slane %v226, 1
      %v239 = vsel %vm236, %v237, %v238
      %v242 = vsel %vm236, %v238, 0.0
      %v243 = vld [vmem:[%s1] sm:$0xff]
      %v244 = vld [vmem:[%s1 + $0x8] sm:$0xff]
      %v245 = vld [vmem:[%s1 + $0x10] sm:$0xff]
      %v246 = vld [vmem:[%s1 + $0x18] sm:$0xff]
      %v247 = vld [vmem:[%s1 + $0x20] sm:$0xff]
      %v248 = vld [vmem:[%s1 + $0x28] sm:$0xff]
      %v249 = vld [vmem:[%s1 + $0x30] sm:$0xff]
      %v250 = vld [vmem:[%s1 + $0x38] sm:$0xff]
      %v251 = vld [vmem:[%s1 + $0x40] sm:$0xff]
      %v252 = vld [vmem:[%s1 + $0x48] sm:$0xff]
      %v253 = vld [vmem:[%s1 + $0x50] sm:$0xff]
      %v254 = vld [vmem:[%s1 + $0x58] sm:$0xff]
      %v255 = vld [vmem:[%s1 + $0x60] sm:$0xff]
      %v256 = vld [vmem:[%s1 + $0x68] sm:$0xff]
      %v257 = vld [vmem:[%s1 + $0x70] sm:$0xff]
      %v258 = vld [vmem:[%s1 + $0x78] sm:$0xff]
      %s259 = scalar_lea.vmem %s1, 128
      %v260 = vld [vmem:[%s259] sm:$0xff]
      %v261 = vld [vmem:[%s259 + $0x8] sm:$0xff]
      %v262 = vld [vmem:[%s259 + $0x10] sm:$0xff]
      %v263 = vld [vmem:[%s259 + $0x18] sm:$0xff]
      %v264 = vld [vmem:[%s259 + $0x20] sm:$0xff]
      %v265 = vld [vmem:[%s259 + $0x28] sm:$0xff]
      %v266 = vld [vmem:[%s259 + $0x30] sm:$0xff]
      %v267 = vld [vmem:[%s259 + $0x38] sm:$0xff]
      %v268 = vld [vmem:[%s259 + $0x40] sm:$0xff]
      %v269 = vld [vmem:[%s259 + $0x48] sm:$0xff]
      %v270 = vld [vmem:[%s259 + $0x50] sm:$0xff]
      %v271 = vld [vmem:[%s259 + $0x58] sm:$0xff]
      %v272 = vld [vmem:[%s259 + $0x60] sm:$0xff]
      %v273 = vld [vmem:[%s259 + $0x68] sm:$0xff]
      %v274 = vld [vmem:[%s259 + $0x70] sm:$0xff]
      %v275 = vld [vmem:[%s259 + $0x78] sm:$0xff]
      %276 = vmatprep.subr.mxu0 0.0
      %277 = vmatpush1.msra.mxu0 %v260
      %278 = vmatprep.subr.mxu0 0.0
      %279 = vmatpush1.msra.mxu0 %v261
      %280 = vmatprep.subr.mxu0 0.0
      %281 = vmatpush1.msra.mxu0 %v262
      %282 = vmatprep.subr.mxu0 0.0
      %283 = vmatpush1.msra.mxu0 %v263
      %284 = vmatprep.subr.mxu0 0.0
      %285 = vmatpush1.msra.mxu0 %v264
      %286 = vmatprep.subr.mxu0 0.0
      %287 = vmatpush1.msra.mxu0 %v265
      %288 = vmatprep.subr.mxu0 0.0
      %289 = vmatpush1.msra.mxu0 %v266
      %290 = vmatprep.subr.mxu0 0.0
      %291 = vmatpush1.msra.mxu0 %v267
      %292 = vmatprep.subr.mxu0 0.0
      %293 = vmatpush1.msra.mxu0 %v268
      %294 = vmatprep.subr.mxu0 0.0
      %295 = vmatpush1.msra.mxu0 %v269
      %296 = vmatprep.subr.mxu0 0.0
      %297 = vmatpush1.msra.mxu0 %v270
      %298 = vmatprep.subr.mxu0 0.0
      %299 = vmatpush1.msra.mxu0 %v271
      %300 = vmatprep.subr.mxu0 0.0
      %301 = vmatpush1.msra.mxu0 %v272
      %302 = vmatprep.subr.mxu0 0.0
      %303 = vmatpush1.msra.mxu0 %v273
      %304 = vmatprep.subr.mxu0 0.0
      %305 = vmatpush1.msra.mxu0 %v274
      %306 = vmatprep.subr.mxu0 0.0
      %307 = vmatpush1.msra.mxu0 %v275
      %308 = vmatprep.subr.mxu0 0.0
      %309 = vmatpush1.msra.mxu0 0.0
      %310 = vmatprep.subr.mxu0 0.0
      %311 = vmatpush1.msra.mxu0 0.0
      %312 = vmatprep.subr.mxu0 0.0
      %313 = vmatpush1.msra.mxu0 0.0
      %314 = vmatprep.subr.mxu0 0.0
      %315 = vmatpush1.msra.mxu0 0.0
      %316 = vmatprep.subr.mxu0 0.0
      %317 = vmatpush1.msra.mxu0 0.0
      %318 = vmatprep.subr.mxu0 0.0
      %319 = vmatpush1.msra.mxu0 0.0
      %320 = vmatprep.subr.mxu0 0.0
      %321 = vmatpush1.msra.mxu0 0.0
      %322 = vmatprep.subr.mxu0 0.0
      %323 = vmatpush1.msra.mxu0 0.0
      %324 = vmatprep.subr.mxu0 0.0
      %325 = vmatpush1.msra.mxu0 0.0
      %326 = vmatprep.subr.mxu0 0.0
      %327 = vmatpush1.msra.mxu0 0.0
      %328 = vmatprep.subr.mxu0 0.0
      %329 = vmatpush1.msra.mxu0 0.0
      %330 = vmatprep.subr.mxu0 0.0
      %331 = vmatpush1.msra.mxu0 0.0
      %332 = vmatprep.subr.mxu0 0.0
      %333 = vmatpush1.msra.mxu0 0.0
      %334 = vmatprep.subr.mxu0 0.0
      %335 = vmatpush1.msra.mxu0 0.0
      %336 = vmatprep.subr.mxu0 0.0
      %337 = vmatpush1.msra.mxu0 0.0
      %338 = vmatprep.subr.mxu0 0.0
      %339 = vmatpush1.msra.mxu0 0.0
      %340 = vmatprep.mubr.f32.mxu0 0.0
      %341 = vmatmul.mubr.f32.gmra.mrb[0].mxu0 %v225
      %v342 = vpop.f32.mrb[0].mxu0
      %v343 = vadd.f32 0.0, %v342
      %v344 = vpop.f32.mrb[0].mxu0
      %345 = vmatprep.mubr.f32.mxu0 0.0
      %346 = vmatmul.mubr.f32.gmra.mrb[0].mxu0 %v226
      %v347 = vpop.f32.mrb[0].mxu0
      %v348 = vadd.f32 0.0, %v347
      %v349 = vpop.f32.mrb[0].mxu0
      %350 = vdwg.mxu0
      %351 = vmatprep.subr.mxu0 0.0
      %352 = vmatpush1.msra.mxu0 %v243
      %353 = vmatprep.subr.mxu0 0.0
      %354 = vmatpush1.msra.mxu0 %v244
      %355 = vmatprep.subr.mxu0 0.0
      %356 = vmatpush1.msra.mxu0 %v245
      %357 = vmatprep.subr.mxu0 0.0
      %358 = vmatpush1.msra.mxu0 %v246
      %359 = vmatprep.subr.mxu0 0.0
      %360 = vmatpush1.msra.mxu0 %v247
      %361 = vmatprep.subr.mxu0 0.0
      %362 = vmatpush1.msra.mxu0 %v248
      %363 = vmatprep.subr.mxu0 0.0
      %364 = vmatpush1.msra.mxu0 %v249
      %365 = vmatprep.subr.mxu0 0.0
      %366 = vmatpush1.msra.mxu0 %v250
      %367 = vmatprep.subr.mxu0 0.0
      %368 = vmatpush1.msra.mxu0 %v251
      %369 = vmatprep.subr.mxu0 0.0
      %370 = vmatpush1.msra.mxu0 %v252
      %371 = vmatprep.subr.mxu0 0.0
      %372 = vmatpush1.msra.mxu0 %v253
      %373 = vmatprep.subr.mxu0 0.0
      %374 = vmatpush1.msra.mxu0 %v254
      %375 = vmatprep.subr.mxu0 0.0
      %376 = vmatpush1.msra.mxu0 %v255
      %377 = vmatprep.subr.mxu0 0.0
      %378 = vmatpush1.msra.mxu0 %v256
      %379 = vmatprep.subr.mxu0 0.0
      %380 = vmatpush1.msra.mxu0 %v257
      %381 = vmatprep.subr.mxu0 0.0
      %382 = vmatpush1.msra.mxu0 %v258
      %383 = vmatprep.subr.mxu0 0.0
      %384 = vmatpush1.msra.mxu0 0.0
      %385 = vmatprep.subr.mxu0 0.0
      %386 = vmatpush1.msra.mxu0 0.0
      %387 = vmatprep.subr.mxu0 0.0
      %388 = vmatpush1.msra.mxu0 0.0
      %389 = vmatprep.subr.mxu0 0.0
      %390 = vmatpush1.msra.mxu0 0.0
      %391 = vmatprep.subr.mxu0 0.0
      %392 = vmatpush1.msra.mxu0 0.0
      %393 = vmatprep.subr.mxu0 0.0
      %394 = vmatpush1.msra.mxu0 0.0
      %395 = vmatprep.subr.mxu0 0.0
      %396 = vmatpush1.msra.mxu0 0.0
      %397 = vmatprep.subr.mxu0 0.0
      %398 = vmatpush1.msra.mxu0 0.0
      %399 = vmatprep.subr.mxu0 0.0
      %400 = vmatpush1.msra.mxu0 0.0
      %401 = vmatprep.subr.mxu0 0.0
      %402 = vmatpush1.msra.mxu0 0.0
      %403 = vmatprep.subr.mxu0 0.0
      %404 = vmatpush1.msra.mxu0 0.0
      %405 = vmatprep.subr.mxu0 0.0
      %406 = vmatpush1.msra.mxu0 0.0
      %407 = vmatprep.subr.mxu0 0.0
      %408 = vmatpush1.msra.mxu0 0.0
      %409 = vmatprep.subr.mxu0 0.0
      %410 = vmatpush1.msra.mxu0 0.0
      %411 = vmatprep.subr.mxu0 0.0
      %412 = vmatpush1.msra.mxu0 0.0
      %413 = vmatprep.subr.mxu0 0.0
      %414 = vmatpush1.msra.mxu0 0.0
      %415 = vmatprep.mubr.f32.mxu0 0.0
      %416 = vmatmul.mubr.f32.gmra.mrb[0].mxu0 %v235
      %v417 = vpop.f32.mrb[0].mxu0
      %v418 = vadd.f32 %v343, %v417
      %v419 = vpop.f32.mrb[0].mxu0
      %420 = vmatprep.mubr.f32.mxu0 0.0
      %421 = vmatmul.mubr.f32.gmra.mrb[0].mxu0 %v232
      %v422 = vpop.f32.mrb[0].mxu0
      %v423 = vadd.f32 %v348, %v422
      %v424 = vpop.f32.mrb[0].mxu0
      %425 = vdwg.mxu0
      %s426 = scalar_lea.vmem %s1, 256
      %v427 = vld [vmem:[%s426] sm:$0xff]
      %v428 = vld [vmem:[%s426 + $0x8] sm:$0xff]
      %v429 = vld [vmem:[%s426 + $0x10] sm:$0xff]
      %v430 = vld [vmem:[%s426 + $0x18] sm:$0xff]
      %v431 = vld [vmem:[%s426 + $0x20] sm:$0xff]
      %v432 = vld [vmem:[%s426 + $0x28] sm:$0xff]
      %v433 = vld [vmem:[%s426 + $0x30] sm:$0xff]
      %v434 = vld [vmem:[%s426 + $0x38] sm:$0xff]
      %v435 = vld [vmem:[%s426 + $0x40] sm:$0xff]
      %v436 = vld [vmem:[%s426 + $0x48] sm:$0xff]
      %v437 = vld [vmem:[%s426 + $0x50] sm:$0xff]
      %v438 = vld [vmem:[%s426 + $0x58] sm:$0xff]
      %v439 = vld [vmem:[%s426 + $0x60] sm:$0xff]
      %v440 = vld [vmem:[%s426 + $0x68] sm:$0xff]
      %v441 = vld [vmem:[%s426 + $0x70] sm:$0xff]
      %v442 = vld [vmem:[%s426 + $0x78] sm:$0xff]
      %443 = vmatprep.subr.mxu0 0.0
      %444 = vmatpush1.msra.mxu0 %v427
      %445 = vmatprep.subr.mxu0 0.0
      %446 = vmatpush1.msra.mxu0 %v428
      %447 = vmatprep.subr.mxu0 0.0
      %448 = vmatpush1.msra.mxu0 %v429
      %449 = vmatprep.subr.mxu0 0.0
      %450 = vmatpush1.msra.mxu0 %v430
      %451 = vmatprep.subr.mxu0 0.0
      %452 = vmatpush1.msra.mxu0 %v431
      %453 = vmatprep.subr.mxu0 0.0
      %454 = vmatpush1.msra.mxu0 %v432
      %455 = vmatprep.subr.mxu0 0.0
      %456 = vmatpush1.msra.mxu0 %v433
      %457 = vmatprep.subr.mxu0 0.0
      %458 = vmatpush1.msra.mxu0 %v434
      %459 = vmatprep.subr.mxu0 0.0
      %460 = vmatpush1.msra.mxu0 %v435
      %461 = vmatprep.subr.mxu0 0.0
      %462 = vmatpush1.msra.mxu0 %v436
      %463 = vmatprep.subr.mxu0 0.0
      %464 = vmatpush1.msra.mxu0 %v437
      %465 = vmatprep.subr.mxu0 0.0
      %466 = vmatpush1.msra.mxu0 %v438
      %467 = vmatprep.subr.mxu0 0.0
      %468 = vmatpush1.msra.mxu0 %v439
      %469 = vmatprep.subr.mxu0 0.0
      %470 = vmatpush1.msra.mxu0 %v440
      %471 = vmatprep.subr.mxu0 0.0
      %472 = vmatpush1.msra.mxu0 %v441
      %473 = vmatprep.subr.mxu0 0.0
      %474 = vmatpush1.msra.mxu0 %v442
      %475 = vmatprep.subr.mxu0 0.0
      %476 = vmatpush1.msra.mxu0 0.0
      %477 = vmatprep.subr.mxu0 0.0
      %478 = vmatpush1.msra.mxu0 0.0
      %479 = vmatprep.subr.mxu0 0.0
      %480 = vmatpush1.msra.mxu0 0.0
      %481 = vmatprep.subr.mxu0 0.0
      %482 = vmatpush1.msra.mxu0 0.0
      %483 = vmatprep.subr.mxu0 0.0
      %484 = vmatpush1.msra.mxu0 0.0
      %485 = vmatprep.subr.mxu0 0.0
      %486 = vmatpush1.msra.mxu0 0.0
      %487 = vmatprep.subr.mxu0 0.0
      %488 = vmatpush1.msra.mxu0 0.0
      %489 = vmatprep.subr.mxu0 0.0
      %490 = vmatpush1.msra.mxu0 0.0
      %491 = vmatprep.subr.mxu0 0.0
      %492 = vmatpush1.msra.mxu0 0.0
      %493 = vmatprep.subr.mxu0 0.0
      %494 = vmatpush1.msra.mxu0 0.0
      %495 = vmatprep.subr.mxu0 0.0
      %496 = vmatpush1.msra.mxu0 0.0
      %497 = vmatprep.subr.mxu0 0.0
      %498 = vmatpush1.msra.mxu0 0.0
      %499 = vmatprep.subr.mxu0 0.0
      %500 = vmatpush1.msra.mxu0 0.0
      %501 = vmatprep.subr.mxu0 0.0
      %502 = vmatpush1.msra.mxu0 0.0
      %503 = vmatprep.subr.mxu0 0.0
      %504 = vmatpush1.msra.mxu0 0.0
      %505 = vmatprep.subr.mxu0 0.0
      %506 = vmatpush1.msra.mxu0 0.0
      %507 = vmatprep.mubr.f32.mxu0 0.0
      %508 = vmatmul.mubr.f32.gmra.mrb[0].mxu0 %v239
      %v509 = vpop.f32.mrb[0].mxu0
      %v510 = vadd.f32 0.0, %v509
      %v511 = vpop.f32.mrb[0].mxu0
      %512 = vmatprep.mubr.f32.mxu0 0.0
      %513 = vmatmul.mubr.f32.gmra.mrb[0].mxu0 %v242
      %v514 = vpop.f32.mrb[0].mxu0
      %v515 = vadd.f32 0.0, %v514
      %v516 = vpop.f32.mrb[0].mxu0
      %517 = vdwg.mxu0
      %v518 = vadd.f32 %v418, %v510
      %v519 = vadd.f32 %v423, %v515
      %v520 = vld [vmem:[%s2] sm:$0x1]
      %v522 = vlaneseq
      %v523 = vshrl.u32 %v522, 7
      %v524 = vsub.s32 0, %v523
      %v525 = vrot.slane %v520, %v524
      %v527 = vadd.f32 %v518, %v525
      %v528 = vadd.f32 %v519, %v525
      %v529 = vmin.f32 %v527, 20.0
      %v530 = vmin.f32 %v528, 20.0
      %v531 = vmul.f32 %v529, 1.442695
      %v532 = vpow.pop %v531
      %v533 = vmul.f32 %v530, 1.442695
      %v534 = vpow.pop %v533
      %v535 = vadd.f32 %v532, 1.0
      %v536 = vadd.f32 %v534, 1.0
      %v537 = vmul.f32 %v535, %v535
      %v538 = vmul.f32 %v536, %v536
      %v539 = vsub.f32 %v537, 1.0
      %v540 = vsub.f32 %v538, 1.0
      %v541 = vadd.f32 %v537, 1.0
      %v542 = vadd.f32 %v538, 1.0
      %v543 = vrcp.pop %v541
      %v544 = vrcp.pop %v542
      %v545 = vmul.f32 %v539, %v543
      %v546 = vmul.f32 %v540, %v544
      %v547 = vmul.f32 %v527, %v545
      %v548 = vmul.f32 %v528, %v546
      %v551 = vrot.slane %v547, 7
      %v552 = vrot.slane %v548, 7
      %v553 = vsel %vm229, %v551, %v552
      %v556 = vsel %vm229, 0.0, %v551
      %v557 = vrot.slane %v547, 1
      %v558 = vrot.slane %v548, 1
      %v559 = vsel %vm236, %v557, %v558
      %v562 = vsel %vm236, %v558, 0.0
      %v563 = vld [vmem:[%s3] sm:$0xff]
      %v564 = vld [vmem:[%s3 + $0x8] sm:$0xff]
      %v565 = vld [vmem:[%s3 + $0x10] sm:$0xff]
      %v566 = vld [vmem:[%s3 + $0x18] sm:$0xff]
      %v567 = vld [vmem:[%s3 + $0x20] sm:$0xff]
      %v568 = vld [vmem:[%s3 + $0x28] sm:$0xff]
      %v569 = vld [vmem:[%s3 + $0x30] sm:$0xff]
      %v570 = vld [vmem:[%s3 + $0x38] sm:$0xff]
      %v571 = vld [vmem:[%s3 + $0x40] sm:$0xff]
      %v572 = vld [vmem:[%s3 + $0x48] sm:$0xff]
      %v573 = vld [vmem:[%s3 + $0x50] sm:$0xff]
      %v574 = vld [vmem:[%s3 + $0x58] sm:$0xff]
      %v575 = vld [vmem:[%s3 + $0x60] sm:$0xff]
      %v576 = vld [vmem:[%s3 + $0x68] sm:$0xff]
      %v577 = vld [vmem:[%s3 + $0x70] sm:$0xff]
      %v578 = vld [vmem:[%s3 + $0x78] sm:$0xff]
      %s579 = scalar_lea.vmem %s3, 128
      %v580 = vld [vmem:[%s579] sm:$0xff]
      %v581 = vld [vmem:[%s579 + $0x8] sm:$0xff]
      %v582 = vld [vmem:[%s579 + $0x10] sm:$0xff]
      %v583 = vld [vmem:[%s579 + $0x18] sm:$0xff]
      %v584 = vld [vmem:[%s579 + $0x20] sm:$0xff]
      %v585 = vld [vmem:[%s579 + $0x28] sm:$0xff]
      %v586 = vld [vmem:[%s579 + $0x30] sm:$0xff]
      %v587 = vld [vmem:[%s579 + $0x38] sm:$0xff]
      %v588 = vld [vmem:[%s579 + $0x40] sm:$0xff]
      %v589 = vld [vmem:[%s579 + $0x48] sm:$0xff]
      %v590 = vld [vmem:[%s579 + $0x50] sm:$0xff]
      %v591 = vld [vmem:[%s579 + $0x58] sm:$0xff]
      %v592 = vld [vmem:[%s579 + $0x60] sm:$0xff]
      %v593 = vld [vmem:[%s579 + $0x68] sm:$0xff]
      %v594 = vld [vmem:[%s579 + $0x70] sm:$0xff]
      %v595 = vld [vmem:[%s579 + $0x78] sm:$0xff]
      %596 = vmatprep.subr.mxu0 0.0
      %597 = vmatpush1.msra.mxu0 %v580
      %598 = vmatprep.subr.mxu0 0.0
      %599 = vmatpush1.msra.mxu0 %v581
      %600 = vmatprep.subr.mxu0 0.0
      %601 = vmatpush1.msra.mxu0 %v582
      %602 = vmatprep.subr.mxu0 0.0
      %603 = vmatpush1.msra.mxu0 %v583
      %604 = vmatprep.subr.mxu0 0.0
      %605 = vmatpush1.msra.mxu0 %v584
      %606 = vmatprep.subr.mxu0 0.0
      %607 = vmatpush1.msra.mxu0 %v585
      %608 = vmatprep.subr.mxu0 0.0
      %609 = vmatpush1.msra.mxu0 %v586
      %610 = vmatprep.subr.mxu0 0.0
      %611 = vmatpush1.msra.mxu0 %v587
      %612 = vmatprep.subr.mxu0 0.0
      %613 = vmatpush1.msra.mxu0 %v588
      %614 = vmatprep.subr.mxu0 0.0
      %615 = vmatpush1.msra.mxu0 %v589
      %616 = vmatprep.subr.mxu0 0.0
      %617 = vmatpush1.msra.mxu0 %v590
      %618 = vmatprep.subr.mxu0 0.0
      %619 = vmatpush1.msra.mxu0 %v591
      %620 = vmatprep.subr.mxu0 0.0
      %621 = vmatpush1.msra.mxu0 %v592
      %622 = vmatprep.subr.mxu0 0.0
      %623 = vmatpush1.msra.mxu0 %v593
      %624 = vmatprep.subr.mxu0 0.0
      %625 = vmatpush1.msra.mxu0 %v594
      %626 = vmatprep.subr.mxu0 0.0
      %627 = vmatpush1.msra.mxu0 %v595
      %628 = vmatprep.subr.mxu0 0.0
      %629 = vmatpush1.msra.mxu0 0.0
      %630 = vmatprep.subr.mxu0 0.0
      %631 = vmatpush1.msra.mxu0 0.0
      %632 = vmatprep.subr.mxu0 0.0
      %633 = vmatpush1.msra.mxu0 0.0
      %634 = vmatprep.subr.mxu0 0.0
      %635 = vmatpush1.msra.mxu0 0.0
      %636 = vmatprep.subr.mxu0 0.0
      %637 = vmatpush1.msra.mxu0 0.0
      %638 = vmatprep.subr.mxu0 0.0
      %639 = vmatpush1.msra.mxu0 0.0
      %640 = vmatprep.subr.mxu0 0.0
      %641 = vmatpush1.msra.mxu0 0.0
      %642 = vmatprep.subr.mxu0 0.0
      %643 = vmatpush1.msra.mxu0 0.0
      %644 = vmatprep.subr.mxu0 0.0
      %645 = vmatpush1.msra.mxu0 0.0
      %646 = vmatprep.subr.mxu0 0.0
      %647 = vmatpush1.msra.mxu0 0.0
      %648 = vmatprep.subr.mxu0 0.0
      %649 = vmatpush1.msra.mxu0 0.0
      %650 = vmatprep.subr.mxu0 0.0
      %651 = vmatpush1.msra.mxu0 0.0
      %652 = vmatprep.subr.mxu0 0.0
      %653 = vmatpush1.msra.mxu0 0.0
      %654 = vmatprep.subr.mxu0 0.0
      %655 = vmatpush1.msra.mxu0 0.0
      %656 = vmatprep.subr.mxu0 0.0
      %657 = vmatpush1.msra.mxu0 0.0
      %658 = vmatprep.subr.mxu0 0.0
      %659 = vmatpush1.msra.mxu0 0.0
      %660 = vmatprep.mubr.f32.mxu0 0.0
      %661 = vmatmul.mubr.f32.gmra.mrb[0].mxu0 %v547
      %v662 = vpop.f32.mrb[0].mxu0
      %v663 = vadd.f32 0.0, %v662
      %v664 = vpop.f32.mrb[0].mxu0
      %665 = vmatprep.mubr.f32.mxu0 0.0
      %666 = vmatmul.mubr.f32.gmra.mrb[0].mxu0 %v548
      %v667 = vpop.f32.mrb[0].mxu0
      %v668 = vadd.f32 0.0, %v667
      %v669 = vpop.f32.mrb[0].mxu0
      %670 = vdwg.mxu0
      %671 = vmatprep.subr.mxu0 0.0
      %672 = vmatpush1.msra.mxu0 %v563
      %673 = vmatprep.subr.mxu0 0.0
      %674 = vmatpush1.msra.mxu0 %v564
      %675 = vmatprep.subr.mxu0 0.0
      %676 = vmatpush1.msra.mxu0 %v565
      %677 = vmatprep.subr.mxu0 0.0
      %678 = vmatpush1.msra.mxu0 %v566
      %679 = vmatprep.subr.mxu0 0.0
      %680 = vmatpush1.msra.mxu0 %v567
      %681 = vmatprep.subr.mxu0 0.0
      %682 = vmatpush1.msra.mxu0 %v568
      %683 = vmatprep.subr.mxu0 0.0
      %684 = vmatpush1.msra.mxu0 %v569
      %685 = vmatprep.subr.mxu0 0.0
      %686 = vmatpush1.msra.mxu0 %v570
      %687 = vmatprep.subr.mxu0 0.0
      %688 = vmatpush1.msra.mxu0 %v571
      %689 = vmatprep.subr.mxu0 0.0
      %690 = vmatpush1.msra.mxu0 %v572
      %691 = vmatprep.subr.mxu0 0.0
      %692 = vmatpush1.msra.mxu0 %v573
      %693 = vmatprep.subr.mxu0 0.0
      %694 = vmatpush1.msra.mxu0 %v574
      %695 = vmatprep.subr.mxu0 0.0
      %696 = vmatpush1.msra.mxu0 %v575
      %697 = vmatprep.subr.mxu0 0.0
      %698 = vmatpush1.msra.mxu0 %v576
      %699 = vmatprep.subr.mxu0 0.0
      %700 = vmatpush1.msra.mxu0 %v577
      %701 = vmatprep.subr.mxu0 0.0
      %702 = vmatpush1.msra.mxu0 %v578
      %703 = vmatprep.subr.mxu0 0.0
      %704 = vmatpush1.msra.mxu0 0.0
      %705 = vmatprep.subr.mxu0 0.0
      %706 = vmatpush1.msra.mxu0 0.0
      %707 = vmatprep.subr.mxu0 0.0
      %708 = vmatpush1.msra.mxu0 0.0
      %709 = vmatprep.subr.mxu0 0.0
      %710 = vmatpush1.msra.mxu0 0.0
      %711 = vmatprep.subr.mxu0 0.0
      %712 = vmatpush1.msra.mxu0 0.0
      %713 = vmatprep.subr.mxu0 0.0
      %714 = vmatpush1.msra.mxu0 0.0
      %715 = vmatprep.subr.mxu0 0.0
      %716 = vmatpush1.msra.mxu0 0.0
      %717 = vmatprep.subr.mxu0 0.0
      %718 = vmatpush1.msra.mxu0 0.0
      %719 = vmatprep.subr.mxu0 0.0
      %720 = vmatpush1.msra.mxu0 0.0
      %721 = vmatprep.subr.mxu0 0.0
      %722 = vmatpush1.msra.mxu0 0.0
      %723 = vmatprep.subr.mxu0 0.0
      %724 = vmatpush1.msra.mxu0 0.0
      %725 = vmatprep.subr.mxu0 0.0
      %726 = vmatpush1.msra.mxu0 0.0
      %727 = vmatprep.subr.mxu0 0.0
      %728 = vmatpush1.msra.mxu0 0.0
      %729 = vmatprep.subr.mxu0 0.0
      %730 = vmatpush1.msra.mxu0 0.0
      %731 = vmatprep.subr.mxu0 0.0
      %732 = vmatpush1.msra.mxu0 0.0
      %733 = vmatprep.subr.mxu0 0.0
      %734 = vmatpush1.msra.mxu0 0.0
      %735 = vmatprep.mubr.f32.mxu0 0.0
      %736 = vmatmul.mubr.f32.gmra.mrb[0].mxu0 %v556
      %v737 = vpop.f32.mrb[0].mxu0
      %v738 = vadd.f32 %v663, %v737
      %v739 = vpop.f32.mrb[0].mxu0
      %740 = vmatprep.mubr.f32.mxu0 0.0
      %741 = vmatmul.mubr.f32.gmra.mrb[0].mxu0 %v553
      %v742 = vpop.f32.mrb[0].mxu0
      %v743 = vadd.f32 %v668, %v742
      %v744 = vpop.f32.mrb[0].mxu0
      %745 = vdwg.mxu0
      %s746 = scalar_lea.vmem %s3, 256
      %v747 = vld [vmem:[%s746] sm:$0xff]
      %v748 = vld [vmem:[%s746 + $0x8] sm:$0xff]
      %v749 = vld [vmem:[%s746 + $0x10] sm:$0xff]
      %v750 = vld [vmem:[%s746 + $0x18] sm:$0xff]
      %v751 = vld [vmem:[%s746 + $0x20] sm:$0xff]
      %v752 = vld [vmem:[%s746 + $0x28] sm:$0xff]
      %v753 = vld [vmem:[%s746 + $0x30] sm:$0xff]
      %v754 = vld [vmem:[%s746 + $0x38] sm:$0xff]
      %v755 = vld [vmem:[%s746 + $0x40] sm:$0xff]
      %v756 = vld [vmem:[%s746 + $0x48] sm:$0xff]
      %v757 = vld [vmem:[%s746 + $0x50] sm:$0xff]
      %v758 = vld [vmem:[%s746 + $0x58] sm:$0xff]
      %v759 = vld [vmem:[%s746 + $0x60] sm:$0xff]
      %v760 = vld [vmem:[%s746 + $0x68] sm:$0xff]
      %v761 = vld [vmem:[%s746 + $0x70] sm:$0xff]
      %v762 = vld [vmem:[%s746 + $0x78] sm:$0xff]
      %763 = vmatprep.subr.mxu0 0.0
      %764 = vmatpush1.msra.mxu0 %v747
      %765 = vmatprep.subr.mxu0 0.0
      %766 = vmatpush1.msra.mxu0 %v748
      %767 = vmatprep.subr.mxu0 0.0
      %768 = vmatpush1.msra.mxu0 %v749
      %769 = vmatprep.subr.mxu0 0.0
      %770 = vmatpush1.msra.mxu0 %v750
      %771 = vmatprep.subr.mxu0 0.0
      %772 = vmatpush1.msra.mxu0 %v751
      %773 = vmatprep.subr.mxu0 0.0
      %774 = vmatpush1.msra.mxu0 %v752
      %775 = vmatprep.subr.mxu0 0.0
      %776 = vmatpush1.msra.mxu0 %v753
      %777 = vmatprep.subr.mxu0 0.0
      %778 = vmatpush1.msra.mxu0 %v754
      %779 = vmatprep.subr.mxu0 0.0
      %780 = vmatpush1.msra.mxu0 %v755
      %781 = vmatprep.subr.mxu0 0.0
      %782 = vmatpush1.msra.mxu0 %v756
      %783 = vmatprep.subr.mxu0 0.0
      %784 = vmatpush1.msra.mxu0 %v757
      %785 = vmatprep.subr.mxu0 0.0
      %786 = vmatpush1.msra.mxu0 %v758
      %787 = vmatprep.subr.mxu0 0.0
      %788 = vmatpush1.msra.mxu0 %v759
      %789 = vmatprep.subr.mxu0 0.0
      %790 = vmatpush1.msra.mxu0 %v760
      %791 = vmatprep.subr.mxu0 0.0
      %792 = vmatpush1.msra.mxu0 %v761
      %793 = vmatprep.subr.mxu0 0.0
      %794 = vmatpush1.msra.mxu0 %v762
      %795 = vmatprep.subr.mxu0 0.0
      %796 = vmatpush1.msra.mxu0 0.0
      %797 = vmatprep.subr.mxu0 0.0
      %798 = vmatpush1.msra.mxu0 0.0
      %799 = vmatprep.subr.mxu0 0.0
      %800 = vmatpush1.msra.mxu0 0.0
      %801 = vmatprep.subr.mxu0 0.0
      %802 = vmatpush1.msra.mxu0 0.0
      %803 = vmatprep.subr.mxu0 0.0
      %804 = vmatpush1.msra.mxu0 0.0
      %805 = vmatprep.subr.mxu0 0.0
      %806 = vmatpush1.msra.mxu0 0.0
      %807 = vmatprep.subr.mxu0 0.0
      %808 = vmatpush1.msra.mxu0 0.0
      %809 = vmatprep.subr.mxu0 0.0
      %810 = vmatpush1.msra.mxu0 0.0
      %811 = vmatprep.subr.mxu0 0.0
      %812 = vmatpush1.msra.mxu0 0.0
      %813 = vmatprep.subr.mxu0 0.0
      %814 = vmatpush1.msra.mxu0 0.0
      %815 = vmatprep.subr.mxu0 0.0
      %816 = vmatpush1.msra.mxu0 0.0
      %817 = vmatprep.subr.mxu0 0.0
      %818 = vmatpush1.msra.mxu0 0.0
      %819 = vmatprep.subr.mxu0 0.0
      %820 = vmatpush1.msra.mxu0 0.0
      %821 = vmatprep.subr.mxu0 0.0
      %822 = vmatpush1.msra.mxu0 0.0
      %823 = vmatprep.subr.mxu0 0.0
      %824 = vmatpush1.msra.mxu0 0.0
      %825 = vmatprep.subr.mxu0 0.0
      %826 = vmatpush1.msra.mxu0 0.0
      %827 = vmatprep.mubr.f32.mxu0 0.0
      %828 = vmatmul.mubr.f32.gmra.mrb[0].mxu0 %v559
      %v829 = vpop.f32.mrb[0].mxu0
      %v830 = vadd.f32 0.0, %v829
      %v831 = vpop.f32.mrb[0].mxu0
      %832 = vmatprep.mubr.f32.mxu0 0.0
      %833 = vmatmul.mubr.f32.gmra.mrb[0].mxu0 %v562
      %v834 = vpop.f32.mrb[0].mxu0
      %v835 = vadd.f32 0.0, %v834
      %v836 = vpop.f32.mrb[0].mxu0
      %837 = vdwg.mxu0
      %v838 = vadd.f32 %v738, %v830
      %v839 = vadd.f32 %v743, %v835
      %v840 = vld [vmem:[%s4] sm:$0x1]
      %v842 = vlaneseq
      %v843 = vshrl.u32 %v842, 7
      %v844 = vsub.s32 0, %v843
      %v845 = vrot.slane %v840, %v844
      %v847 = vadd.f32 %v838, %v845
      %v848 = vadd.f32 %v839, %v845
      %v849 = vmin.f32 %v847, 20.0
      %v850 = vmin.f32 %v848, 20.0
      %v851 = vmul.f32 %v849, 1.442695
      %v852 = vpow.pop %v851
      %v853 = vmul.f32 %v850, 1.442695
      %v854 = vpow.pop %v853
      %v855 = vadd.f32 %v852, 1.0
      %v856 = vadd.f32 %v854, 1.0
      %v857 = vmul.f32 %v855, %v855
      %v858 = vmul.f32 %v856, %v856
      %v859 = vsub.f32 %v857, 1.0
      %v860 = vsub.f32 %v858, 1.0
      %v861 = vadd.f32 %v857, 1.0
      %v862 = vadd.f32 %v858, 1.0
      %v863 = vrcp.pop %v861
      %v864 = vrcp.pop %v862
      %v865 = vmul.f32 %v859, %v863
      %v866 = vmul.f32 %v860, %v864
      %v867 = vmul.f32 %v847, %v865
      %v868 = vmul.f32 %v848, %v866
      %869 = vst [vmem:[%s224] sm:$0xff] %v867
      %870 = vst [vmem:[%s224 + $0x8] sm:$0xff] %v868
      %p871 = scmp.lt.s32.totalorder %s16, 1
      %s872 = scalar_select %p871, %s16, 1
      %s873 = smul.addr %s872, 2
      %s874 = smul.addr %s873, 8
      %s875 = scalar_lea.vmem %s5, %s874
      // Predicated region
      $region41: #{_lambda_.1} parent=39 // pred_check
        %p876 = pneg %p144
      $region42: #{_lambda_.1} parent=39 // pred_check_branch
        %878 = sbr.rel (%p876) target = $region44
      $region43: #{_lambda_.1} parent=39 // pred_region
        _
      $region44: #{_lambda_.1} parent=39 // pred_fallthru
        _
    $region40: #{_lambda_.1} parent=5 // pred_fallthru
      _
    %p879 = scmp.le.s32.totalorder 2, %s11
    // Predicated region
    $region45: #{_lambda_.1} parent=5 // pred_check
      %p880 = pneg %p879
    $region46: #{_lambda_.1} parent=5 // pred_check_branch
      %882 = sbr.rel (%p880) target = $region48
    $region47: #{_lambda_.1} parent=5 // pred_region
      %s883 = ssub.s32 %s11, 2
      // Predicated region
      $region49: #{_lambda_.1} parent=47 // pred_check
        %p884 = pneg %p150
      $region50: #{_lambda_.1} parent=47 // pred_check_branch
        %886 = sbr.rel (%p884) target = $region52
      $region51: #{_lambda_.1} parent=47 // pred_region
        %p887 = scmp.lt.s32.totalorder %s17, 1
        %s888 = scalar_select %p887, %s17, 1
        %s889 = smul.addr %s888, 2
        %s890 = smul.addr %s889, 8
        %s891 = scalar_lea.vmem %s5, %s890
      $region52: #{_lambda_.1} parent=47 // pred_fallthru
        _
    $region48: #{_lambda_.1} parent=5 // pred_fallthru
      _
  $region6: #{_lambda_.1} parent=0 // loop_footer
    %s15 = sadd.s32 1, %s11
  $region7: #{_lambda_.1} parent=0 // loop_footer_branch
    %10 = sbr.rel target = $region3
  $region8: #{_lambda_.1} parent=0 // loop_exit
    _

</llo_original>
